<compile_context>
chip_gen: v6e
topology: v6e:2x2x1
jax: 0.10.0
libtpu: 0.0.40
codegen_flags: <defaults>
</compile_context>

<pallas_src>
import functools

import jax
import jax.numpy as jnp
from jax.experimental import pallas as pl
from jax.experimental.pallas import tpu as pltpu


def cross_attention_kernel(x_ref, ctx_ref, gamma_ref, wq_ref, wkv_ref, wout_ref,
                           out_ref, *, heads, dim_head, scale, eps):
    # x_ref:    (bt, n, dim) f32      ctx_ref: (bt, m, cdim) bf16
    # gamma:    (1, dim) f32
    # wq_ref:   (dim, heads*d) bf16   wkv_ref: (cdim, 2*d) bf16
    # wout_ref: (heads*d, dim) bf16   out_ref: (bt, n, dim)
    bt, n, dim = x_ref.shape
    _, m, cdim = ctx_ref.shape
    d = dim_head

    # ---- LayerNorm (f32) over features, batch*seq rows fused into M. ----
    x = x_ref[...].reshape(bt * n, dim)
    mu = jnp.mean(x, axis=-1, keepdims=True)
    xc = x - mu
    var = jnp.mean(xc * xc, axis=-1, keepdims=True)
    # beta is a registered zero buffer -> dropped.  The attention scale is
    # folded into xn once (q = xn @ Wq is linear), no per-head multiplies.
    xn = (xc * jax.lax.rsqrt(var + eps)) * (gamma_ref[...] * scale)
    xn = xn.astype(jnp.bfloat16)

    # ---- Q projection: single full-lane-width MXU matmul for all rows. ----
    q = jnp.dot(xn, wq_ref[...], preferred_element_type=jnp.float32)      # (bt*n, heads*d) f32

    # ---- K/V projection: single matmul (context_norm = Identity). ----
    ctx = ctx_ref[...].reshape(bt * m, cdim)                              # bf16
    kv = jnp.dot(ctx, wkv_ref[...], preferred_element_type=jnp.float32)   # (bt*m, 2*d) f32

    # ---- Attention per batch element (K/V differ per batch); heads stacked
    #      along the sublane (M) axis so sim / PV are single matmuls. ----
    for b in range(bt):                                   # static unroll, bt small
        qb = q[b * n:(b + 1) * n, :]                      # (n, heads*d)
        q_stk = jnp.concatenate(
            [qb[:, h * d:(h + 1) * d] for h in range(heads)], axis=0
        ).astype(jnp.bfloat16)                            # (heads*n, d)
        kb = kv[b * m:(b + 1) * m, :d].astype(jnp.bfloat16)      # (m, d)
        vb = kv[b * m:(b + 1) * m, d:].astype(jnp.bfloat16)      # (m, d)

        # sim[i, j] = sum_d q_stk[i, d] * kb[j, d]  (contract on K's minor dim;
        # Mosaic takes the transposed-RHS MXU path — no per-head transpose).
        sim = jax.lax.dot_general(q_stk, kb, (((1,), (1,)), ((), ())),
                                  preferred_element_type=jnp.float32)     # (heads*n, m)
        sim = sim - jnp.max(sim, axis=-1, keepdims=True)
        p = jnp.exp(sim)
        inv = pl.reciprocal(jnp.sum(p, axis=-1, keepdims=True), approx=True)
        attn = (p * inv).astype(jnp.bfloat16)

        o_stk = jnp.dot(attn, vb, preferred_element_type=jnp.float32)     # (heads*n, d)
        # Back to lane-concatenated heads so the output projection is one
        # full 128-lane-wide matmul instead of a per-head sum.
        o_cat = jnp.concatenate(
            [o_stk[h * n:(h + 1) * n, :] for h in range(heads)], axis=-1
        ).astype(jnp.bfloat16)                            # (n, heads*d)
        out_b = jnp.dot(o_cat, wout_ref[...], preferred_element_type=jnp.float32)
        out_ref[b] = out_b.astype(out_ref.dtype)


def cross_attention(x, context, gamma, wq, wkv, wout, *, heads, dim_head,
                    eps=1e-5, batch_block=None):
    """Pallas CrossAttention forward.

    x:       (b, n, dim)           context: (b, m, cdim)
    gamma:   (dim,)  LayerNorm weight   (beta is a zero buffer -> omitted)
    wq:      (heads*dim_head, dim)   == to_q.weight
    wkv:     (2*dim_head, cdim)      == to_kv.weight
    wout:    (dim, heads*dim_head)   == to_out.weight
    """
    b, n, dim = x.shape
    _, m, cdim = context.shape
    d = dim_head
    inner = heads * d
    assert wq.shape == (inner, dim)
    assert wkv.shape == (2 * d, cdim)
    assert wout.shape == (dim, inner)
    scale = float(d) ** -0.5

    if batch_block is None:
        # >=2 grid steps keeps both v7x TensorCores busy; multiple batch rows
        # per step amortizes the ~0.35us per-grid-step pipeline overhead.
        batch_block = b // 2 if (b >= 4 and b % 2 == 0) else 1
    assert b % batch_block == 0, "batch must be divisible by batch_block"
    grid = (b // batch_block,)

    # bf16 MXU operands (f32 accumulation happens inside the kernel).
    ctx_bf = context.astype(jnp.bfloat16)
    wq_k = wq.T.astype(jnp.bfloat16)        # (dim, inner)
    wkv_k = wkv.T.astype(jnp.bfloat16)      # (cdim, 2*d): [:, :d] -> K, [:, d:] -> V
    wout_k = wout.T.astype(jnp.bfloat16)    # (inner, dim)
    gamma2 = gamma.reshape(1, dim).astype(jnp.float32)

    kernel = functools.partial(cross_attention_kernel, heads=heads,
                               dim_head=d, scale=scale, eps=eps)

    flops = 2 * b * (n * dim * inner + m * cdim * (2 * d)
                     + 2 * heads * n * m * d + n * inner * dim)
    bytes_accessed = (x.size * 4 + ctx_bf.size * 2 + gamma2.size * 4
                      + (wq_k.size + wkv_k.size + wout_k.size) * 2
                      + b * n * dim * x.dtype.itemsize)
    cost = pl.CostEstimate(flops=flops,
                           transcendentals=b * heads * n * m,
                           bytes_accessed=bytes_accessed)

    return pl.pallas_call(
        kernel,
        out_shape=jax.ShapeDtypeStruct((b, n, dim), x.dtype),
        grid=grid,
        in_specs=[
            pl.BlockSpec((batch_block, n, dim), lambda i: (i, 0, 0)),
            pl.BlockSpec((batch_block, m, cdim), lambda i: (i, 0, 0)),
            # Constant index_maps: parameters stay resident in VMEM across the
            # batch grid.  (pipeline_mode=pl.Buffered(1) would halve their VMEM
            # footprint once dim grows; irrelevant at 128.)
            pl.BlockSpec((1, dim), lambda i: (0, 0)),
            pl.BlockSpec((dim, inner), lambda i: (0, 0)),
            pl.BlockSpec((cdim, 2 * d), lambda i: (0, 0)),
            pl.BlockSpec((inner, dim), lambda i: (0, 0)),
        ],
        out_specs=pl.BlockSpec((batch_block, n, dim), lambda i: (i, 0, 0)),
        compiler_params=pltpu.CompilerParams(
            dimension_semantics=("parallel",)),
        cost_estimate=cost,
    )(x, ctx_bf, gamma2, wq_k, wkv_k, wout_k)


def cross_attention_ref(x, context, gamma, wq, wkv, wout, *, heads, dim_head,
                        eps=1e-5):
    """Pure-JAX (f32) reference matching the PyTorch module."""
    mu = x.mean(-1, keepdims=True)
    var = ((x - mu) ** 2).mean(-1, keepdims=True)
    xn = (x - mu) / jnp.sqrt(var + eps) * gamma
    b, n, _ = x.shape
    q = jnp.einsum('bnd,ed->bne', xn, wq)
    q = q.reshape(b, n, heads, dim_head).transpose(0, 2, 1, 3)
    q = q * dim_head ** -0.5
    kv = jnp.einsum('bjd,ed->bje', context, wkv)
    k, v = kv[..., :dim_head], kv[..., dim_head:]
    sim = jnp.einsum('bhid,bjd->bhij', q, k)
    sim = sim - sim.max(-1, keepdims=True)
    attn = jax.nn.softmax(sim, axis=-1)
    out = jnp.einsum('bhij,bjd->bhid', attn, v)
    out = out.transpose(0, 2, 1, 3).reshape(b, n, heads * dim_head)
    return jnp.einsum('bne,de->bnd', out, wout)


if __name__ == "__main__":
    key = jax.random.PRNGKey(0)
    batch, n, m = 4, 8, 16
    dim, cdim = 128, 128          # lane-dense feature dims
    heads, dim_head = 2, 64       # inner_dim = 128
    inner_dim = heads * dim_head

    k1, k2, k3, k4, k5 = jax.random.split(key, 5)
    x = jax.random.normal(k1, (batch, n, dim), jnp.float32)
    context = jax.random.normal(k2, (batch, m, cdim), jnp.float32)
    wq = jax.random.normal(k3, (inner_dim, dim), jnp.float32) * 0.02
    wkv = jax.random.normal(k4, (2 * dim_head, cdim), jnp.float32) * 0.02
    wout = jax.random.normal(k5, (dim, inner_dim), jnp.float32) * 0.02
    gamma = jnp.ones((dim,), jnp.float32)   # LayerNorm weight (torch.ones init)

    out = cross_attention(x, context, gamma, wq, wkv, wout,
                          heads=heads, dim_head=dim_head, batch_block=2)
    out = jax.block_until_ready(out)

    ref = cross_attention_ref(x, context, gamma, wq, wkv, wout,
                              heads=heads, dim_head=dim_head)
    assert out.shape == (batch, n, dim)
    # bf16 MXU operands + approx-reciprocal softmax -> loosened tolerance.
    max_err = float(jnp.max(jnp.abs(out - ref)))
    assert max_err < 2e-2, max_err
    print("KERNEL_OK")
</pallas_src>

<mosaic_0001>
module attributes {stable_mosaic.version = 11 : i64} {
  func.func @cross_attention_kernel(%arg0: i32, %arg1: memref<2x8x128xf32, #tpu.memory_space<vmem>>, %arg2: memref<2x16x128xbf16, #tpu.memory_space<vmem>>, %arg3: memref<1x128xf32, #tpu.memory_space<vmem>>, %arg4: memref<128x128xbf16, #tpu.memory_space<vmem>>, %arg5: memref<128x128xbf16, #tpu.memory_space<vmem>>, %arg6: memref<128x128xbf16, #tpu.memory_space<vmem>>, %arg7: memref<2x8x128xf32, #tpu.memory_space<vmem>>) attributes {dimension_semantics = [#tpu.dimension_semantics<parallel>], iteration_bounds = array<i64: 2>, scalar_prefetch = 0 : i64, scratch_operands = 0 : i64, tpu.core_type = #tpu.core_type<tc>, window_params = [{transform_indices = @transform_0, window_bounds = array<i64: 2, 8, 128>}, {transform_indices = @transform_1, window_bounds = array<i64: 2, 16, 128>}, {pipeline_mode = #tpu.pipeline_mode<synchronous>, transform_indices = @transform_2, window_bounds = array<i64: 1, 128>}, {pipeline_mode = #tpu.pipeline_mode<synchronous>, transform_indices = @transform_3, window_bounds = array<i64: 128, 128>}, {pipeline_mode = #tpu.pipeline_mode<synchronous>, transform_indices = @transform_4, window_bounds = array<i64: 128, 128>}, {pipeline_mode = #tpu.pipeline_mode<synchronous>, transform_indices = @transform_5, window_bounds = array<i64: 128, 128>}, {transform_indices = @transform_6, window_bounds = array<i64: 2, 8, 128>}]} {
    %c0 = arith.constant 0 : index
    %c0_0 = arith.constant 0 : index
    %c0_1 = arith.constant 0 : index
    %0 = vector.load %arg1[%c0, %c0_0, %c0_1] : memref<2x8x128xf32, #tpu.memory_space<vmem>>, vector<2x8x128xf32>
    %1 = vector.shape_cast %0 : vector<2x8x128xf32> to vector<16x128xf32>
    %cst = arith.constant dense<0.000000e+00> : vector<16xf32>
    %2 = vector.multi_reduction <add>, %1, %cst [1] : vector<16x128xf32> to vector<16xf32>
    %3 = vector.shape_cast %2 : vector<16xf32> to vector<16x1xf32>
    %cst_2 = arith.constant 1.280000e+02 : f32
    %4 = vector.broadcast %cst_2 : f32 to vector<16x1xf32>
    %5 = arith.divf %3, %4 : vector<16x1xf32>
    %6 = vector.broadcast %5 : vector<16x1xf32> to vector<16x128xf32>
    %7 = arith.subf %1, %6 : vector<16x128xf32>
    %8 = arith.mulf %7, %7 : vector<16x128xf32>
    %cst_3 = arith.constant dense<0.000000e+00> : vector<16xf32>
    %9 = vector.multi_reduction <add>, %8, %cst_3 [1] : vector<16x128xf32> to vector<16xf32>
    %10 = vector.shape_cast %9 : vector<16xf32> to vector<16x1xf32>
    %cst_4 = arith.constant 1.280000e+02 : f32
    %11 = vector.broadcast %cst_4 : f32 to vector<16x1xf32>
    %12 = arith.divf %10, %11 : vector<16x1xf32>
    %cst_5 = arith.constant 9.99999974E-6 : f32
    %13 = vector.broadcast %cst_5 : f32 to vector<16x1xf32>
    %14 = arith.addf %12, %13 : vector<16x1xf32>
    %15 = math.rsqrt %14 : vector<16x1xf32>
    %16 = vector.broadcast %15 : vector<16x1xf32> to vector<16x128xf32>
    %17 = arith.mulf %7, %16 : vector<16x128xf32>
    %c0_6 = arith.constant 0 : index
    %c0_7 = arith.constant 0 : index
    %18 = vector.load %arg3[%c0_6, %c0_7] : memref<1x128xf32, #tpu.memory_space<vmem>>, vector<1x128xf32>
    %cst_8 = arith.constant 1.250000e-01 : f32
    %19 = vector.broadcast %cst_8 : f32 to vector<1x128xf32>
    %20 = arith.mulf %18, %19 : vector<1x128xf32>
    %21 = vector.broadcast %20 : vector<1x128xf32> to vector<16x128xf32>
    %22 = arith.mulf %17, %21 : vector<16x128xf32>
    %23 = arith.truncf %22 : vector<16x128xf32> to vector<16x128xbf16>
    %c0_9 = arith.constant 0 : index
    %c0_10 = arith.constant 0 : index
    %24 = vector.load %arg4[%c0_9, %c0_10] : memref<128x128xbf16, #tpu.memory_space<vmem>>, vector<128x128xbf16>
    %cst_11 = arith.constant dense<0.000000e+00> : vector<16x128xf32>
    %25 = tpu.matmul %23, %24, %cst_11 {dimension_numbers = #tpu.dot_dimension_numbers<[1], [0], [0], [1], [0, 0, 1, 1], [], []>} : vector<16x128xbf16>, vector<128x128xbf16>, vector<16x128xf32> -> vector<16x128xf32>
    %c0_12 = arith.constant 0 : index
    %c0_13 = arith.constant 0 : index
    %c0_14 = arith.constant 0 : index
    %26 = vector.load %arg2[%c0_12, %c0_13, %c0_14] : memref<2x16x128xbf16, #tpu.memory_space<vmem>>, vector<2x16x128xbf16>
    %27 = vector.shape_cast %26 : vector<2x16x128xbf16> to vector<32x128xbf16>
    %c0_15 = arith.constant 0 : index
    %c0_16 = arith.constant 0 : index
    %28 = vector.load %arg5[%c0_15, %c0_16] : memref<128x128xbf16, #tpu.memory_space<vmem>>, vector<128x128xbf16>
    %cst_17 = arith.constant dense<0.000000e+00> : vector<32x128xf32>
    %29 = tpu.matmul %27, %28, %cst_17 {dimension_numbers = #tpu.dot_dimension_numbers<[1], [0], [0], [1], [0, 0, 1, 1], [], []>} : vector<32x128xbf16>, vector<128x128xbf16>, vector<32x128xf32> -> vector<32x128xf32>
    %30 = vector.extract_strided_slice %25 {offsets = [0, 0], sizes = [8, 128], strides = [1, 1]} : vector<16x128xf32> to vector<8x128xf32>
    %31 = vector.extract_strided_slice %30 {offsets = [0, 0], sizes = [8, 64], strides = [1, 1]} : vector<8x128xf32> to vector<8x64xf32>
    %32 = vector.extract_strided_slice %30 {offsets = [0, 64], sizes = [8, 64], strides = [1, 1]} : vector<8x128xf32> to vector<8x64xf32>
    %33 = tpu.concatenate %31, %32 in 0 : vector<8x64xf32>, vector<8x64xf32> -> vector<16x64xf32>
    %34 = arith.truncf %33 : vector<16x64xf32> to vector<16x64xbf16>
    %35 = vector.extract_strided_slice %29 {offsets = [0, 0], sizes = [16, 64], strides = [1, 1]} : vector<32x128xf32> to vector<16x64xf32>
    %36 = arith.truncf %35 : vector<16x64xf32> to vector<16x64xbf16>
    %37 = vector.extract_strided_slice %29 {offsets = [0, 64], sizes = [16, 64], strides = [1, 1]} : vector<32x128xf32> to vector<16x64xf32>
    %38 = arith.truncf %37 : vector<16x64xf32> to vector<16x64xbf16>
    %cst_18 = arith.constant dense<0.000000e+00> : vector<16x16xf32>
    %39 = tpu.matmul %34, %36, %cst_18 {dimension_numbers = #tpu.dot_dimension_numbers<[1], [1], [0], [0], [0, 0, 1, 0], [], []>} : vector<16x64xbf16>, vector<16x64xbf16>, vector<16x16xf32> -> vector<16x16xf32>
    %cst_19 = arith.constant dense<0xFF800000> : vector<16xf32>
    %40 = vector.multi_reduction <maximumf>, %39, %cst_19 [1] : vector<16x16xf32> to vector<16xf32>
    %41 = vector.shape_cast %40 : vector<16xf32> to vector<16x1xf32>
    %42 = vector.broadcast %41 : vector<16x1xf32> to vector<16x16xf32>
    %43 = arith.subf %39, %42 : vector<16x16xf32>
    %44 = math.exp %43 : vector<16x16xf32>
    %cst_20 = arith.constant dense<0.000000e+00> : vector<16xf32>
    %45 = vector.multi_reduction <add>, %44, %cst_20 [1] : vector<16x16xf32> to vector<16xf32>
    %46 = vector.shape_cast %45 : vector<16xf32> to vector<16x1xf32>
    %47 = tpu.reciprocal %46 {approx = true} : vector<16x1xf32> -> vector<16x1xf32>
    %48 = vector.broadcast %47 : vector<16x1xf32> to vector<16x16xf32>
    %49 = arith.mulf %44, %48 : vector<16x16xf32>
    %50 = arith.truncf %49 : vector<16x16xf32> to vector<16x16xbf16>
    %cst_21 = arith.constant dense<0.000000e+00> : vector<16x64xf32>
    %51 = tpu.matmul %50, %38, %cst_21 {dimension_numbers = #tpu.dot_dimension_numbers<[1], [0], [0], [1], [0, 0, 1, 1], [], []>} : vector<16x16xbf16>, vector<16x64xbf16>, vector<16x64xf32> -> vector<16x64xf32>
    %52 = vector.extract_strided_slice %51 {offsets = [0, 0], sizes = [8, 64], strides = [1, 1]} : vector<16x64xf32> to vector<8x64xf32>
    %53 = vector.extract_strided_slice %51 {offsets = [8, 0], sizes = [8, 64], strides = [1, 1]} : vector<16x64xf32> to vector<8x64xf32>
    %54 = tpu.concatenate %52, %53 in 1 : vector<8x64xf32>, vector<8x64xf32> -> vector<8x128xf32>
    %55 = arith.truncf %54 : vector<8x128xf32> to vector<8x128xbf16>
    %c0_22 = arith.constant 0 : index
    %c0_23 = arith.constant 0 : index
    %56 = vector.load %arg6[%c0_22, %c0_23] : memref<128x128xbf16, #tpu.memory_space<vmem>>, vector<128x128xbf16>
    %cst_24 = arith.constant dense<0.000000e+00> : vector<8x128xf32>
    %57 = tpu.matmul %55, %56, %cst_24 {dimension_numbers = #tpu.dot_dimension_numbers<[1], [0], [0], [1], [0, 0, 1, 1], [], []>} : vector<8x128xbf16>, vector<128x128xbf16>, vector<8x128xf32> -> vector<8x128xf32>
    %c0_25 = arith.constant 0 : index
    %c0_26 = arith.constant 0 : index
    %c0_27 = arith.constant 0 : index
    %58 = vector.load %arg7[%c0_25, %c0_26, %c0_27] : memref<2x8x128xf32, #tpu.memory_space<vmem>>, vector<1x8x128xf32>
    %59 = vector.shape_cast %58 : vector<1x8x128xf32> to vector<8x128xf32>
    %60 = vector.shape_cast %57 : vector<8x128xf32> to vector<1x8x128xf32>
    tpu.vector_store %arg7[%c0_25, %c0_26, %c0_27], %60 {strides = array<i32>} : memref<2x8x128xf32, #tpu.memory_space<vmem>>, vector<1x8x128xf32>,
    %61 = vector.extract_strided_slice %25 {offsets = [8, 0], sizes = [8, 128], strides = [1, 1]} : vector<16x128xf32> to vector<8x128xf32>
    %62 = vector.extract_strided_slice %61 {offsets = [0, 0], sizes = [8, 64], strides = [1, 1]} : vector<8x128xf32> to vector<8x64xf32>
    %63 = vector.extract_strided_slice %61 {offsets = [0, 64], sizes = [8, 64], strides = [1, 1]} : vector<8x128xf32> to vector<8x64xf32>
    %64 = tpu.concatenate %62, %63 in 0 : vector<8x64xf32>, vector<8x64xf32> -> vector<16x64xf32>
    %65 = arith.truncf %64 : vector<16x64xf32> to vector<16x64xbf16>
    %66 = vector.extract_strided_slice %29 {offsets = [16, 0], sizes = [16, 64], strides = [1, 1]} : vector<32x128xf32> to vector<16x64xf32>
    %67 = arith.truncf %66 : vector<16x64xf32> to vector<16x64xbf16>
    %68 = vector.extract_strided_slice %29 {offsets = [16, 64], sizes = [16, 64], strides = [1, 1]} : vector<32x128xf32> to vector<16x64xf32>
    %69 = arith.truncf %68 : vector<16x64xf32> to vector<16x64xbf16>
    %cst_28 = arith.constant dense<0.000000e+00> : vector<16x16xf32>
    %70 = tpu.matmul %65, %67, %cst_28 {dimension_numbers = #tpu.dot_dimension_numbers<[1], [1], [0], [0], [0, 0, 1, 0], [], []>} : vector<16x64xbf16>, vector<16x64xbf16>, vector<16x16xf32> -> vector<16x16xf32>
    %cst_29 = arith.constant dense<0xFF800000> : vector<16xf32>
    %71 = vector.multi_reduction <maximumf>, %70, %cst_29 [1] : vector<16x16xf32> to vector<16xf32>
    %72 = vector.shape_cast %71 : vector<16xf32> to vector<16x1xf32>
    %73 = vector.broadcast %72 : vector<16x1xf32> to vector<16x16xf32>
    %74 = arith.subf %70, %73 : vector<16x16xf32>
    %75 = math.exp %74 : vector<16x16xf32>
    %cst_30 = arith.constant dense<0.000000e+00> : vector<16xf32>
    %76 = vector.multi_reduction <add>, %75, %cst_30 [1] : vector<16x16xf32> to vector<16xf32>
    %77 = vector.shape_cast %76 : vector<16xf32> to vector<16x1xf32>
    %78 = tpu.reciprocal %77 {approx = true} : vector<16x1xf32> -> vector<16x1xf32>
    %79 = vector.broadcast %78 : vector<16x1xf32> to vector<16x16xf32>
    %80 = arith.mulf %75, %79 : vector<16x16xf32>
    %81 = arith.truncf %80 : vector<16x16xf32> to vector<16x16xbf16>
    %cst_31 = arith.constant dense<0.000000e+00> : vector<16x64xf32>
    %82 = tpu.matmul %81, %69, %cst_31 {dimension_numbers = #tpu.dot_dimension_numbers<[1], [0], [0], [1], [0, 0, 1, 1], [], []>} : vector<16x16xbf16>, vector<16x64xbf16>, vector<16x64xf32> -> vector<16x64xf32>
    %83 = vector.extract_strided_slice %82 {offsets = [0, 0], sizes = [8, 64], strides = [1, 1]} : vector<16x64xf32> to vector<8x64xf32>
    %84 = vector.extract_strided_slice %82 {offsets = [8, 0], sizes = [8, 64], strides = [1, 1]} : vector<16x64xf32> to vector<8x64xf32>
    %85 = tpu.concatenate %83, %84 in 1 : vector<8x64xf32>, vector<8x64xf32> -> vector<8x128xf32>
    %86 = arith.truncf %85 : vector<8x128xf32> to vector<8x128xbf16>
    %c0_32 = arith.constant 0 : index
    %c0_33 = arith.constant 0 : index
    %87 = vector.load %arg6[%c0_32, %c0_33] : memref<128x128xbf16, #tpu.memory_space<vmem>>, vector<128x128xbf16>
    %cst_34 = arith.constant dense<0.000000e+00> : vector<8x128xf32>
    %88 = tpu.matmul %86, %87, %cst_34 {dimension_numbers = #tpu.dot_dimension_numbers<[1], [0], [0], [1], [0, 0, 1, 1], [], []>} : vector<8x128xbf16>, vector<128x128xbf16>, vector<8x128xf32> -> vector<8x128xf32>
    %c1 = arith.constant 1 : index
    %c0_35 = arith.constant 0 : index
    %c0_36 = arith.constant 0 : index
    %89 = vector.load %arg7[%c1, %c0_35, %c0_36] : memref<2x8x128xf32, #tpu.memory_space<vmem>>, vector<1x8x128xf32>
    %90 = vector.shape_cast %89 : vector<1x8x128xf32> to vector<8x128xf32>
    %91 = vector.shape_cast %88 : vector<8x128xf32> to vector<1x8x128xf32>
    tpu.vector_store %arg7[%c1, %c0_35, %c0_36], %91 {strides = array<i32>} : memref<2x8x128xf32, #tpu.memory_space<vmem>>, vector<1x8x128xf32>,
    return
  }
  func.func @transform_0(%arg0: i32) -> (i32, i32, i32) {
    %c0_i32 = arith.constant 0 : i32
    %c0_i32_0 = arith.constant 0 : i32
    %c0_i32_1 = arith.constant 0 : i32
    return %arg0, %c0_i32, %c0_i32_0 : i32, i32, i32
  }
  func.func @transform_1(%arg0: i32) -> (i32, i32, i32) {
    %c0_i32 = arith.constant 0 : i32
    %c0_i32_0 = arith.constant 0 : i32
    %c0_i32_1 = arith.constant 0 : i32
    return %arg0, %c0_i32, %c0_i32_0 : i32, i32, i32
  }
  func.func @transform_2(%arg0: i32) -> (i32, i32) {
    %c0_i32 = arith.constant 0 : i32
    %c0_i32_0 = arith.constant 0 : i32
    %c0_i32_1 = arith.constant 0 : i32
    return %c0_i32, %c0_i32_0 : i32, i32
  }
  func.func @transform_3(%arg0: i32) -> (i32, i32) {
    %c0_i32 = arith.constant 0 : i32
    %c0_i32_0 = arith.constant 0 : i32
    %c0_i32_1 = arith.constant 0 : i32
    return %c0_i32, %c0_i32_0 : i32, i32
  }
  func.func @transform_4(%arg0: i32) -> (i32, i32) {
    %c0_i32 = arith.constant 0 : i32
    %c0_i32_0 = arith.constant 0 : i32
    %c0_i32_1 = arith.constant 0 : i32
    return %c0_i32, %c0_i32_0 : i32, i32
  }
  func.func @transform_5(%arg0: i32) -> (i32, i32) {
    %c0_i32 = arith.constant 0 : i32
    %c0_i32_0 = arith.constant 0 : i32
    %c0_i32_1 = arith.constant 0 : i32
    return %c0_i32, %c0_i32_0 : i32, i32
  }
  func.func @transform_6(%arg0: i32) -> (i32, i32, i32) {
    %c0_i32 = arith.constant 0 : i32
    %c0_i32_0 = arith.constant 0 : i32
    %c0_i32_1 = arith.constant 0 : i32
    return %arg0, %c0_i32, %c0_i32_0 : i32, i32, i32
  }
}

</mosaic_0001>

<llo_original>
// kernel: tpu_custom_call.1
$region0: #{tpu_custom_call.1}
  #allocation0 [shape = 'u32[]', space=smem, size = 0x4, offset = 0x4, fixed_abs, tag = 'smem constant byte address 0x4 - core index']
  #allocation1 [shape = 'u32[144,128]{1,0:T(1,128)}', space=vmem, size = 0x12000, scoped, tag = 'internal scratch']
  %s0 = inlined_call_operand.hbm [shape: f32[4,8,128], index: 0, kind: input, shape index: {}]
  %s1 = inlined_call_operand.hbm [shape: bf16[4,16,128], index: 1, kind: input, shape index: {}]
  %s2 = inlined_call_operand.vmem [shape: f32[1,128], index: 2, kind: input, shape index: {}]
  %s3 = inlined_call_operand.hbm [shape: bf16[128,128], index: 3, kind: input, shape index: {}]
  %s4 = inlined_call_operand.hbm [shape: bf16[128,128], index: 4, kind: input, shape index: {}]
  %s5 = inlined_call_operand.hbm [shape: bf16[128,128], index: 5, kind: input, shape index: {}]
  %s6 = inlined_call_operand.hbm [shape: f32[4,8,128], index: 6, kind: output, shape index: {}]
  %s7 = sld [smem:[#allocation0]]
  $region77: #{tpu_custom_call.1} parent=0
    _
  %s9 = ssub.s32 1, %s7
  %s10 = scalar_select 0, %s9, %s7
  $region1: #{tpu_custom_call.1} parent=0
    #allocation2 [shape = 'u8[16384]{0}', space=vmem, size = 0x4000, scoped, tag = 'input window, operand 0']
    #allocation3 [shape = 's32[2]{0}', space=sflag, size = 0x8, scoped, tag = 'scoped memory for tpu_custom_call.1']
    #allocation4 [shape = 's32[2]{0}', space=sflag, size = 0x8, scoped, tag = 'scoped memory for tpu_custom_call.1']
    #allocation5 [shape = 'u8[16384]{0}', space=vmem, size = 0x4000, scoped, tag = 'input window, operand 1']
    #allocation6 [shape = 's32[2]{0}', space=sflag, size = 0x8, scoped, tag = 'scoped memory for tpu_custom_call.1']
    #allocation7 [shape = 'u8[32768]{0}', space=vmem, size = 0x8000, scoped, tag = 'input window, operand 3, single buffered']
    #allocation8 [shape = 'u8[32768]{0}', space=vmem, size = 0x8000, scoped, tag = 'input window, operand 4, single buffered']
    #allocation9 [shape = 's32[1]{0}', space=sflag, size = 0x4, scoped, tag = 'scoped memory for tpu_custom_call.1']
    #allocation10 [shape = 'u8[32768]{0}', space=vmem, size = 0x8000, scoped, tag = 'input window, operand 5, single buffered']
    #allocation11 [shape = 'u8[16384]{0}', space=vmem, size = 0x4000, scoped, tag = 'output window, operand 0']
    %11 = vsyncpa [#allocation3], 0
    %s12 = scalar_lea.sflag [#allocation3], 1
    %13 = vsyncpa %s12, 0
    %14 = vsyncpa [#allocation6], 0
    %s15 = scalar_lea.sflag [#allocation6], 1
    %16 = vsyncpa %s15, 0
    %17 = vsyncpa [#allocation9], 0
    %18 = vsyncpa [#allocation4], 0
    %s19 = scalar_lea.sflag [#allocation4], 1
    %20 = vsyncpa %s19, 0
    loop: start=0, step=1, limit=4
    $region2: #{tpu_custom_call.1} parent=1 // loop_pre_header
      _
    $region3: #{tpu_custom_call.1} parent=1 // loop_header
      %s22 = sphi 0, %s26
      %p23 = scmp.ge.s32.totalorder %s22, 4
      %s32 = sphi 0, %s34
      %s35 = sphi 0, %s32
      %s36 = sphi 0, %s35
      %s52 = sphi 0, %s36
      %s58 = sphi 0, %s60
      %s61 = sphi 0, %s58
      %s62 = sphi 0, %s61
      %s78 = sphi 0, %s62
      %s82 = sphi 0, %s82
      %s84 = sphi 0, %s82
      %s85 = sphi 0, %s84
      %s99 = sphi 0, %s85
      %s103 = sphi 0, %s103
      %s105 = sphi 0, %s103
      %s106 = sphi 0, %s105
      %s120 = sphi 0, %s106
      %s124 = sphi 0, %s124
      %s126 = sphi 0, %s124
      %s127 = sphi 0, %s126
      %s141 = sphi 0, %s127
      %s145 = sphi 0, %s145
      %s147 = sphi 0, %s145
      %s148 = sphi 0, %s147
      %s162 = sphi 0, %s148
      %s168 = sphi 0, %s170
      %s171 = sphi 0, %s168
      %s172 = sphi 0, %s171
      %s188 = sphi 0, %s172
    $region4: #{tpu_custom_call.1} parent=1 // loop_header_branch
      %25 = sbr.rel (%p23) target = $region8
    $region5: #{tpu_custom_call.1} parent=1 // loop_body
      %s27 = ssub.s32 %s22, 1
      %s28 = ssub.s32 %s22, 2
      %s29 = sadd.s32 %s22, 1
      %s30 = ssub.s32 %s22, %s29
      %p31 = scmp.eq.s32.totalorder %s30, 0
      %s33 = sadd.s32 %s32, 1
      %s34 = scalar_select %p31, %s32, %s33
      %p37 = pneg %p31
      %p38 = scmp.eq.s32.totalorder %s22, 1
      %p39 = por %p37, %p38
      %p40 = scmp.ne.s32.totalorder %s32, %s35
      %p41 = scmp.eq.s32.totalorder %s22, 0
      %p42 = por %p40, %p41
      %p43 = scmp.ne.s32.totalorder %s32, %s35
      %p44 = scmp.eq.s32.totalorder %s27, 1
      %p45 = por %p43, %p44
      %p46 = scmp.ne.s32.totalorder %s35, %s36
      %p47 = scmp.eq.s32.totalorder %s27, 0
      %p48 = por %p46, %p47
      %p49 = scmp.ne.s32.totalorder %s35, %s36
      %p50 = scmp.eq.s32.totalorder %s28, 1
      %p51 = por %p49, %p50
      %p53 = scmp.ne.s32.totalorder %s36, %s52
      %p54 = scmp.eq.s32.totalorder %s28, 0
      %p55 = por %p53, %p54
      %s56 = ssub.s32 %s22, %s29
      %p57 = scmp.eq.s32.totalorder %s56, 0
      %s59 = sadd.s32 %s58, 1
      %s60 = scalar_select %p57, %s58, %s59
      %p63 = pneg %p57
      %p64 = scmp.eq.s32.totalorder %s22, 1
      %p65 = por %p63, %p64
      %p66 = scmp.ne.s32.totalorder %s58, %s61
      %p67 = scmp.eq.s32.totalorder %s22, 0
      %p68 = por %p66, %p67
      %p69 = scmp.ne.s32.totalorder %s58, %s61
      %p70 = scmp.eq.s32.totalorder %s27, 1
      %p71 = por %p69, %p70
      %p72 = scmp.ne.s32.totalorder %s61, %s62
      %p73 = scmp.eq.s32.totalorder %s27, 0
      %p74 = por %p72, %p73
      %p75 = scmp.ne.s32.totalorder %s61, %s62
      %p76 = scmp.eq.s32.totalorder %s28, 1
      %p77 = por %p75, %p76
      %p79 = scmp.ne.s32.totalorder %s62, %s78
      %p80 = scmp.eq.s32.totalorder %s28, 0
      %p81 = por %p79, %p80
      %s83 = sadd.s32 %s82, 1
      %p86 = scmp.eq.s32.totalorder %s22, 1
      %p87 = scmp.ne.s32.totalorder %s82, %s84
      %p88 = scmp.eq.s32.totalorder %s22, 0
      %p89 = por %p87, %p88
      %p90 = scmp.ne.s32.totalorder %s82, %s84
      %p91 = scmp.eq.s32.totalorder %s27, 1
      %p92 = por %p90, %p91
      %p93 = scmp.ne.s32.totalorder %s84, %s85
      %p94 = scmp.eq.s32.totalorder %s27, 0
      %p95 = por %p93, %p94
      %p96 = scmp.ne.s32.totalorder %s84, %s85
      %p97 = scmp.eq.s32.totalorder %s28, 1
      %p98 = por %p96, %p97
      %p100 = scmp.ne.s32.totalorder %s85, %s99
      %p101 = scmp.eq.s32.totalorder %s28, 0
      %p102 = por %p100, %p101
      %s104 = sadd.s32 %s103, 1
      %p107 = scmp.eq.s32.totalorder %s22, 1
      %p108 = scmp.ne.s32.totalorder %s103, %s105
      %p109 = scmp.eq.s32.totalorder %s22, 0
      %p110 = por %p108, %p109
      %p111 = scmp.ne.s32.totalorder %s103, %s105
      %p112 = scmp.eq.s32.totalorder %s27, 1
      %p113 = por %p111, %p112
      %p114 = scmp.ne.s32.totalorder %s105, %s106
      %p115 = scmp.eq.s32.totalorder %s27, 0
      %p116 = por %p114, %p115
      %p117 = scmp.ne.s32.totalorder %s105, %s106
      %p118 = scmp.eq.s32.totalorder %s28, 1
      %p119 = por %p117, %p118
      %p121 = scmp.ne.s32.totalorder %s106, %s120
      %p122 = scmp.eq.s32.totalorder %s28, 0
      %p123 = por %p121, %p122
      %s125 = sadd.s32 %s124, 1
      %p128 = scmp.eq.s32.totalorder %s22, 1
      %p129 = scmp.ne.s32.totalorder %s124, %s126
      %p130 = scmp.eq.s32.totalorder %s22, 0
      %p131 = por %p129, %p130
      %p132 = scmp.ne.s32.totalorder %s124, %s126
      %p133 = scmp.eq.s32.totalorder %s27, 1
      %p134 = por %p132, %p133
      %p135 = scmp.ne.s32.totalorder %s126, %s127
      %p136 = scmp.eq.s32.totalorder %s27, 0
      %p137 = por %p135, %p136
      %p138 = scmp.ne.s32.totalorder %s126, %s127
      %p139 = scmp.eq.s32.totalorder %s28, 1
      %p140 = por %p138, %p139
      %p142 = scmp.ne.s32.totalorder %s127, %s141
      %p143 = scmp.eq.s32.totalorder %s28, 0
      %p144 = por %p142, %p143
      %s146 = sadd.s32 %s145, 1
      %p149 = scmp.eq.s32.totalorder %s22, 1
      %p150 = scmp.ne.s32.totalorder %s145, %s147
      %p151 = scmp.eq.s32.totalorder %s22, 0
      %p152 = por %p150, %p151
      %p153 = scmp.ne.s32.totalorder %s145, %s147
      %p154 = scmp.eq.s32.totalorder %s27, 1
      %p155 = por %p153, %p154
      %p156 = scmp.ne.s32.totalorder %s147, %s148
      %p157 = scmp.eq.s32.totalorder %s27, 0
      %p158 = por %p156, %p157
      %p159 = scmp.ne.s32.totalorder %s147, %s148
      %p160 = scmp.eq.s32.totalorder %s28, 1
      %p161 = por %p159, %p160
      %p163 = scmp.ne.s32.totalorder %s148, %s162
      %p164 = scmp.eq.s32.totalorder %s28, 0
      %p165 = por %p163, %p164
      %s166 = ssub.s32 %s22, %s29
      %p167 = scmp.eq.s32.totalorder %s166, 0
      %s169 = sadd.s32 %s168, 1
      %s170 = scalar_select %p167, %s168, %s169
      %p173 = pneg %p167
      %p174 = scmp.eq.s32.totalorder %s22, 1
      %p175 = por %p173, %p174
      %p176 = scmp.ne.s32.totalorder %s168, %s171
      %p177 = scmp.eq.s32.totalorder %s22, 0
      %p178 = por %p176, %p177
      %p179 = scmp.ne.s32.totalorder %s168, %s171
      %p180 = scmp.eq.s32.totalorder %s27, 1
      %p181 = por %p179, %p180
      %p182 = scmp.ne.s32.totalorder %s171, %s172
      %p183 = scmp.eq.s32.totalorder %s27, 0
      %p184 = por %p182, %p183
      %p185 = scmp.ne.s32.totalorder %s171, %s172
      %p186 = scmp.eq.s32.totalorder %s28, 1
      %p187 = por %p185, %p186
      %p189 = scmp.ne.s32.totalorder %s172, %s188
      %p190 = scmp.eq.s32.totalorder %s28, 0
      %p191 = por %p189, %p190
      %p192 = scmp.le.s32.totalorder 1, %s22
      %p193 = scmp.lt.s32.totalorder %s22, 3
      %p194 = pnand %p192, %p193
      %p195 = pneg %p194
      // Predicated region
      $region9: #{tpu_custom_call.1} parent=5 // pred_check
        _
      $region10: #{tpu_custom_call.1} parent=5 // pred_check_branch
        %197 = sbr.rel (%p194) target = $region12
      $region11: #{tpu_custom_call.1} parent=5 // pred_region
        %s198 = ssub.s32 %s22, 1
        // Predicated region
        $region13: #{tpu_custom_call.1} parent=11 // pred_check
          %p199 = pneg %p95
        $region14: #{tpu_custom_call.1} parent=11 // pred_check_branch
          %201 = sbr.rel (%p199) target = $region16
        $region15: #{tpu_custom_call.1} parent=11 // pred_region
          _
        $region16: #{tpu_custom_call.1} parent=11 // pred_fallthru
          _
        // Predicated region
        $region17: #{tpu_custom_call.1} parent=11 // pred_check
          %p202 = pneg %p116
        $region18: #{tpu_custom_call.1} parent=11 // pred_check_branch
          %204 = sbr.rel (%p202) target = $region20
        $region19: #{tpu_custom_call.1} parent=11 // pred_region
          %s206 = ssub.s32 1024, 1024
          %207 = vsyncadd [#allocation6], %s206
          %s208 = sshll.u32 [#allocation7], 4
          %s209 = int_to_ptr.vmem [resolvable:$true] %s208
          %214 = dma.hbm_to_vmem [thread:$0]  %s3, 1024, %s209, [#allocation6], 64, 64, 4
        $region20: #{tpu_custom_call.1} parent=11 // pred_fallthru
          _
        // Predicated region
        $region21: #{tpu_custom_call.1} parent=11 // pred_check
          %p215 = pneg %p137
        $region22: #{tpu_custom_call.1} parent=11 // pred_check_branch
          %217 = sbr.rel (%p215) target = $region24
        $region23: #{tpu_custom_call.1} parent=11 // pred_region
          %s219 = ssub.s32 1024, 1024
          %220 = vsyncadd [#allocation9], %s219
          %s221 = sshll.u32 [#allocation8], 4
          %s222 = int_to_ptr.vmem [resolvable:$true] %s221
          %227 = dma.hbm_to_vmem [thread:$0]  %s4, 1024, %s222, [#allocation9], 64, 64, 4
        $region24: #{tpu_custom_call.1} parent=11 // pred_fallthru
          _
        // Predicated region
        $region25: #{tpu_custom_call.1} parent=11 // pred_check
          %p228 = pneg %p158
        $region26: #{tpu_custom_call.1} parent=11 // pred_check_branch
          %230 = sbr.rel (%p228) target = $region28
        $region27: #{tpu_custom_call.1} parent=11 // pred_region
          %s232 = ssub.s32 1024, 1024
          %233 = vsyncadd [#allocation9], %s232
          %s234 = sshll.u32 [#allocation10], 4
          %s235 = int_to_ptr.vmem [resolvable:$true] %s234
          %240 = dma.hbm_to_vmem [thread:$0]  %s5, 1024, %s235, [#allocation9], 64, 64, 4
        $region28: #{tpu_custom_call.1} parent=11 // pred_fallthru
          _
      $region12: #{tpu_custom_call.1} parent=5 // pred_fallthru
        _
      %p241 = scmp.lt.s32.totalorder %s22, 2
      // Predicated region
      $region29: #{tpu_custom_call.1} parent=5 // pred_check
        %p242 = pneg %p241
      $region30: #{tpu_custom_call.1} parent=5 // pred_check_branch
        %244 = sbr.rel (%p242) target = $region32
      $region31: #{tpu_custom_call.1} parent=5 // pred_region
        // Predicated region
        $region33: #{tpu_custom_call.1} parent=31 // pred_check
          %p245 = pneg %p42
        $region34: #{tpu_custom_call.1} parent=31 // pred_check_branch
          %247 = sbr.rel (%p245) target = $region36
        $region35: #{tpu_custom_call.1} parent=31 // pred_region
          %s248 = sand.u32 %s32, 1
          %s249 = scalar_lea.sflag [#allocation3], %s248
          %s250 = sand.u32 %s32, 1
          %s251 = smul.addr %s250, 16
          %s252 = scalar_lea.vmem [#allocation2], %s251
          %s253 = smul.u32 2, %s22
          %s255 = ssub.s32 256, 256
          %256 = vsyncadd %s249, %s255
          %s257 = smul.addr %s253, 128
          %s258 = scalar_lea.hbm %s0, %s257
          %s259 = sshll.u32 %s252, 4
          %s260 = int_to_ptr.vmem [resolvable:$true] %s259
          %265 = dma.hbm_to_vmem [thread:$0]  %s258, 256, %s260, %s249, 128, 128, 8
        $region36: #{tpu_custom_call.1} parent=31 // pred_fallthru
          _
        // Predicated region
        $region37: #{tpu_custom_call.1} parent=31 // pred_check
          %p266 = pneg %p68
        $region38: #{tpu_custom_call.1} parent=31 // pred_check_branch
          %268 = sbr.rel (%p266) target = $region40
        $region39: #{tpu_custom_call.1} parent=31 // pred_region
          %s269 = sand.u32 %s22, 1
          %s270 = scalar_lea.sflag [#allocation6], %s269
          %s271 = sand.u32 %s58, 1
          %s272 = smul.addr %s271, 16
          %s273 = scalar_lea.vmem [#allocation5], %s272
          %s274 = smul.u32 2, %s22
          %s276 = ssub.s32 256, 256
          %277 = vsyncadd %s270, %s276
          %s278 = smul.addr %s274, 2
          %s279 = smul.addr %s278, 64
          %s280 = scalar_lea.hbm %s1, %s279
          %s281 = sshll.u32 %s273, 4
          %s282 = int_to_ptr.vmem [resolvable:$true] %s281
          %287 = dma.hbm_to_vmem [thread:$0]  %s280, 256, %s282, %s270, 64, 64, 4
        $region40: #{tpu_custom_call.1} parent=31 // pred_fallthru
          _
      $region32: #{tpu_custom_call.1} parent=5 // pred_fallthru
        _
      %p288 = scmp.le.s32.totalorder 1, %s22
      %p289 = scmp.lt.s32.totalorder %s22, 3
      %p290 = pnand %p288, %p289
      %p291 = pneg %p290
      // Predicated region
      $region41: #{tpu_custom_call.1} parent=5 // pred_check
        _
      $region42: #{tpu_custom_call.1} parent=5 // pred_check_branch
        %293 = sbr.rel (%p290) target = $region44
      $region43: #{tpu_custom_call.1} parent=5 // pred_region
        %s294 = ssub.s32 %s22, 1
        %s295 = sand.u32 %s35, 1
        %s296 = scalar_lea.sflag [#allocation3], %s295
        %s297 = sand.u32 %s35, 1
        %s298 = smul.addr %s297, 16
        %s299 = scalar_lea.vmem [#allocation2], %s298
        // Predicated region
        $region45: #{tpu_custom_call.1} parent=43 // pred_check
          %p300 = pneg %p48
        $region46: #{tpu_custom_call.1} parent=43 // pred_check_branch
          %302 = sbr.rel (%p300) target = $region48
        $region47: #{tpu_custom_call.1} parent=43 // pred_region
          %303 = dma.done %s296, 256
        $region48: #{tpu_custom_call.1} parent=43 // pred_fallthru
          _
        %s304 = sand.u32 %s27, 1
        %s305 = scalar_lea.sflag [#allocation6], %s304
        %s306 = sand.u32 %s61, 1
        %s307 = smul.addr %s306, 16
        %s308 = scalar_lea.vmem [#allocation5], %s307
        // Predicated region
        $region49: #{tpu_custom_call.1} parent=43 // pred_check
          %p309 = pneg %p74
        $region50: #{tpu_custom_call.1} parent=43 // pred_check_branch
          %311 = sbr.rel (%p309) target = $region52
        $region51: #{tpu_custom_call.1} parent=43 // pred_region
          %312 = dma.done %s305, 256
        $region52: #{tpu_custom_call.1} parent=43 // pred_fallthru
          _
        // Predicated region
        $region53: #{tpu_custom_call.1} parent=43 // pred_check
          %p313 = pneg %p116
        $region54: #{tpu_custom_call.1} parent=43 // pred_check_branch
          %315 = sbr.rel (%p313) target = $region56
        $region55: #{tpu_custom_call.1} parent=43 // pred_region
          %316 = dma.done [#allocation6], 1024
        $region56: #{tpu_custom_call.1} parent=43 // pred_fallthru
          _
        // Predicated region
        $region57: #{tpu_custom_call.1} parent=43 // pred_check
          %p317 = pneg %p137
        $region58: #{tpu_custom_call.1} parent=43 // pred_check_branch
          %319 = sbr.rel (%p317) target = $region60
        $region59: #{tpu_custom_call.1} parent=43 // pred_region
          %320 = dma.done [#allocation9], 1024
        $region60: #{tpu_custom_call.1} parent=43 // pred_fallthru
          _
        // Predicated region
        $region61: #{tpu_custom_call.1} parent=43 // pred_check
          %p321 = pneg %p158
        $region62: #{tpu_custom_call.1} parent=43 // pred_check_branch
          %323 = sbr.rel (%p321) target = $region64
        $region63: #{tpu_custom_call.1} parent=43 // pred_region
          %324 = dma.done [#allocation9], 1024
        $region64: #{tpu_custom_call.1} parent=43 // pred_fallthru
          _
        %s325 = sand.u32 %s35, 1
        %s326 = scalar_lea.sflag [#allocation3], %s325
        %s327 = sand.u32 %s35, 1
        %s328 = smul.addr %s327, 16
        %s329 = scalar_lea.vmem [#allocation2], %s328
        %p330 = pneg %p48
        %p331 = pneg %p45
        %s332 = sand.u32 %s27, 1
        %s333 = scalar_lea.sflag [#allocation6], %s332
        %s334 = sand.u32 %s61, 1
        %s335 = smul.addr %s334, 16
        %s336 = scalar_lea.vmem [#allocation5], %s335
        %p337 = pneg %p74
        %p338 = pneg %p71
        %p339 = pneg %p95
        %p340 = pneg %p92
        %p341 = pneg %p116
        %p342 = pneg %p113
        %p343 = pneg %p137
        %p344 = pneg %p134
        %p345 = pneg %p158
        %p346 = pneg %p155
        %p347 = pneg %p184
        %p348 = pneg %p181
        %s349 = sand.u32 %s171, 1
        %s350 = scalar_lea.sflag [#allocation4], %s349
        %s351 = sand.u32 %s171, 1
        %s352 = smul.addr %s351, 16
        %s353 = scalar_lea.vmem [#allocation11], %s352
        %s354 = smul.u32 2, %s27
        %s355 = smul.u32 2, %s27
        %s356 = smul.u32 2, %s27
        %v358 = vld [vmem:[%s299] sm:$0xff]
        %v359 = vld [vmem:[%s299 + $0x8] sm:$0xff]
        %360 = vadd.xlane.f32.xlu0 %v358
        %v361 = vpop.xlane.xlu0 %360
        %362 = vadd.xlane.f32.xlu0 %v359
        %v363 = vpop.xlane.xlu0 %362
        %v364 = vrcp.pop 128.0
        %v365 = vmul.f32 %v361, %v364
        %v366 = vmul.f32 %v363, %v364
        %v367 = vsub.f32 %v358, %v365
        %v368 = vsub.f32 %v359, %v366
        %v369 = vmul.f32 %v367, %v367
        %v370 = vmul.f32 %v368, %v368
        %371 = vadd.xlane.f32.xlu0 %v369
        %v372 = vpop.xlane.xlu0 %371
        %373 = vadd.xlane.f32.xlu0 %v370
        %v374 = vpop.xlane.xlu0 %373
        %v375 = vmul.f32 %v372, %v364
        %v376 = vmul.f32 %v374, %v364
        %v377 = vadd.f32 %v375, 1e-05
        %v378 = vadd.f32 %v376, 1e-05
        %v379 = vrsqrt.pop %v377
        %v380 = vrsqrt.pop %v378
        %v381 = vmul.f32 %v367, %v379
        %v382 = vmul.f32 %v368, %v380
        %v383 = vld [vmem:[%s2] sm:$0x1]
        %v384 = vmul.f32 %v383, 0.125
        %v386 = vlaneseq
        %v387 = vshrl.u32 %v386, 7
        %v388 = vsub.s32 0, %v387
        %v389 = vrot.slane %v384, %v388
        %v391 = vmul.f32 %v381, %v389
        %v392 = vmul.f32 %v382, %v389
        %v393 = vpack.c.bf16 %v392, %v391
        %v394 = vld [vmem:[#allocation7] sm:$0xf]
        %v395 = vld [vmem:[#allocation7 + $0x4] sm:$0xf]
        %v396 = vld [vmem:[#allocation7 + $0x8] sm:$0xf]
        %v397 = vld [vmem:[#allocation7 + $0xc] sm:$0xf]
        %v398 = vld [vmem:[#allocation7 + $0x10] sm:$0xf]
        %v399 = vld [vmem:[#allocation7 + $0x14] sm:$0xf]
        %v400 = vld [vmem:[#allocation7 + $0x18] sm:$0xf]
        %v401 = vld [vmem:[#allocation7 + $0x1c] sm:$0xf]
        %v402 = vld [vmem:[#allocation7 + $0x20] sm:$0xf]
        %v403 = vld [vmem:[#allocation7 + $0x24] sm:$0xf]
        %v404 = vld [vmem:[#allocation7 + $0x28] sm:$0xf]
        %v405 = vld [vmem:[#allocation7 + $0x2c] sm:$0xf]
        %v406 = vld [vmem:[#allocation7 + $0x30] sm:$0xf]
        %v407 = vld [vmem:[#allocation7 + $0x34] sm:$0xf]
        %v408 = vld [vmem:[#allocation7 + $0x38] sm:$0xf]
        %v409 = vld [vmem:[#allocation7 + $0x3c] sm:$0xf]
        %v426 = vunpack.c.l.b16 %v394
        %v427 = vunpack.c.l.b16 %v395
        %v428 = vunpack.c.l.b16 %v396
        %v429 = vunpack.c.l.b16 %v397
        %v430 = vunpack.c.l.b16 %v398
        %v431 = vunpack.c.l.b16 %v399
        %v432 = vunpack.c.l.b16 %v400
        %v433 = vunpack.c.l.b16 %v401
        %v434 = vunpack.c.l.b16 %v402
        %v435 = vunpack.c.l.b16 %v403
        %v436 = vunpack.c.l.b16 %v404
        %v437 = vunpack.c.l.b16 %v405
        %v438 = vunpack.c.l.b16 %v406
        %v439 = vunpack.c.l.b16 %v407
        %v440 = vunpack.c.l.b16 %v408
        %v441 = vunpack.c.l.b16 %v409
        %v442 = vpack.c.b16 %v427, %v426
        %v443 = vpack.c.b16 %v429, %v428
        %v444 = vpack.c.b16 %v431, %v430
        %v445 = vpack.c.b16 %v433, %v432
        %v446 = vpack.c.b16 %v435, %v434
        %v447 = vpack.c.b16 %v437, %v436
        %v448 = vpack.c.b16 %v439, %v438
        %v449 = vpack.c.b16 %v441, %v440
        %458 = vmatprep.subr.bf16.mxu0 0
        %459 = vmatpush1.bf16.msra.mxu0 %v449
        %460 = vmatprep.subr.bf16.mxu0 0
        %461 = vmatpush1.bf16.msra.mxu0 %v448
        %462 = vmatprep.subr.bf16.mxu0 0
        %463 = vmatpush1.bf16.msra.mxu0 %v447
        %464 = vmatprep.subr.bf16.mxu0 0
        %465 = vmatpush1.bf16.msra.mxu0 %v446
        %466 = vmatprep.subr.bf16.mxu0 0
        %467 = vmatpush1.bf16.msra.mxu0 %v445
        %468 = vmatprep.subr.bf16.mxu0 0
        %469 = vmatpush1.bf16.msra.mxu0 %v444
        %470 = vmatprep.subr.bf16.mxu0 0
        %471 = vmatpush1.bf16.msra.mxu0 %v443
        %472 = vmatprep.subr.bf16.mxu0 0
        %473 = vmatpush1.bf16.msra.mxu0 %v442
        %474 = vmatprep.subr.bf16.mxu0 0
        %475 = vmatpush2.bf16.msra.mxu0 0
        %476 = vmatprep.subr.bf16.mxu0 0
        %477 = vmatpush2.bf16.msra.mxu0 0
        %478 = vmatprep.subr.bf16.mxu0 0
        %479 = vmatpush2.bf16.msra.mxu0 0
        %480 = vmatprep.subr.bf16.mxu0 0
        %481 = vmatpush2.bf16.msra.mxu0 0
        %482 = vmatprep.subr.bf16.mxu0 0
        %483 = vmatpush2.bf16.msra.mxu0 0
        %484 = vmatprep.subr.bf16.mxu0 0
        %485 = vmatpush2.bf16.msra.mxu0 0
        %486 = vmatprep.subr.bf16.mxu0 0
        %487 = vmatpush2.bf16.msra.mxu0 0
        %488 = vmatprep.subr.bf16.mxu0 0
        %489 = vmatpush2.bf16.msra.mxu0 0
        %490 = vmatprep.mubr.bf16.mxu0 0
        %491 = vmatmul.mubr.bf16.gmra.mxu0 %v393
        %v492 = vpop.f32.mrf.mxu0
        %v493 = vadd.f32 0.0, %v492
        %v494 = vpop.f32.mrf.mxu0
        %v495 = vpop.f32.mrf.mxu0
        %v496 = vadd.f32 0.0, %v495
        %v497 = vpop.f32.mrf.mxu0
        %498 = vdwg.mxu0
        %v499 = vld [vmem:[%s308] sm:$0xf]
        %v500 = vld [vmem:[%s308 + $0x4] sm:$0xf]
        %v501 = vld [vmem:[%s308 + $0x8] sm:$0xf]
        %v502 = vld [vmem:[%s308 + $0xc] sm:$0xf]
        %v503 = vld [vmem:[#allocation8] sm:$0xf]
        %v504 = vld [vmem:[#allocation8 + $0x4] sm:$0xf]
        %v505 = vld [vmem:[#allocation8 + $0x8] sm:$0xf]
        %v506 = vld [vmem:[#allocation8 + $0xc] sm:$0xf]
        %v507 = vld [vmem:[#allocation8 + $0x10] sm:$0xf]
        %v508 = vld [vmem:[#allocation8 + $0x14] sm:$0xf]
        %v509 = vld [vmem:[#allocation8 + $0x18] sm:$0xf]
        %v510 = vld [vmem:[#allocation8 + $0x1c] sm:$0xf]
        %v511 = vld [vmem:[#allocation8 + $0x20] sm:$0xf]
        %v512 = vld [vmem:[#allocation8 + $0x24] sm:$0xf]
        %v513 = vld [vmem:[#allocation8 + $0x28] sm:$0xf]
        %v514 = vld [vmem:[#allocation8 + $0x2c] sm:$0xf]
        %v515 = vld [vmem:[#allocation8 + $0x30] sm:$0xf]
        %v516 = vld [vmem:[#allocation8 + $0x34] sm:$0xf]
        %v517 = vld [vmem:[#allocation8 + $0x38] sm:$0xf]
        %v518 = vld [vmem:[#allocation8 + $0x3c] sm:$0xf]
        %v523 = vunpack.c.l.b16 %v499
        %v524 = vunpack.c.l.b16 %v500
        %v525 = vunpack.c.l.b16 %v501
        %v526 = vunpack.c.l.b16 %v502
        %v527 = vpack.c.b16 %v524, %v523
        %v528 = vpack.c.b16 %v526, %v525
        %v547 = vunpack.c.l.b16 %v503
        %v548 = vunpack.c.l.b16 %v504
        %v549 = vunpack.c.l.b16 %v505
        %v550 = vunpack.c.l.b16 %v506
        %v551 = vunpack.c.l.b16 %v507
        %v552 = vunpack.c.l.b16 %v508
        %v553 = vunpack.c.l.b16 %v509
        %v554 = vunpack.c.l.b16 %v510
        %v555 = vunpack.c.l.b16 %v511
        %v556 = vunpack.c.l.b16 %v512
        %v557 = vunpack.c.l.b16 %v513
        %v558 = vunpack.c.l.b16 %v514
        %v559 = vunpack.c.l.b16 %v515
        %v560 = vunpack.c.l.b16 %v516
        %v561 = vunpack.c.l.b16 %v517
        %v562 = vunpack.c.l.b16 %v518
        %v563 = vpack.c.b16 %v548, %v547
        %v564 = vpack.c.b16 %v550, %v549
        %v565 = vpack.c.b16 %v552, %v551
        %v566 = vpack.c.b16 %v554, %v553
        %v567 = vpack.c.b16 %v556, %v555
        %v568 = vpack.c.b16 %v558, %v557
        %v569 = vpack.c.b16 %v560, %v559
        %v570 = vpack.c.b16 %v562, %v561
        %579 = vmatprep.subr.bf16.mxu0 0
        %580 = vmatpush1.bf16.msra.mxu0 %v570
        %581 = vmatprep.subr.bf16.mxu0 0
        %582 = vmatpush1.bf16.msra.mxu0 %v569
        %583 = vmatprep.subr.bf16.mxu0 0
        %584 = vmatpush1.bf16.msra.mxu0 %v568
        %585 = vmatprep.subr.bf16.mxu0 0
        %586 = vmatpush1.bf16.msra.mxu0 %v567
        %587 = vmatprep.subr.bf16.mxu0 0
        %588 = vmatpush1.bf16.msra.mxu0 %v566
        %589 = vmatprep.subr.bf16.mxu0 0
        %590 = vmatpush1.bf16.msra.mxu0 %v565
        %591 = vmatprep.subr.bf16.mxu0 0
        %592 = vmatpush1.bf16.msra.mxu0 %v564
        %593 = vmatprep.subr.bf16.mxu0 0
        %594 = vmatpush1.bf16.msra.mxu0 %v563
        %595 = vmatprep.subr.bf16.mxu0 0
        %596 = vmatpush2.bf16.msra.mxu0 0
        %597 = vmatprep.subr.bf16.mxu0 0
        %598 = vmatpush2.bf16.msra.mxu0 0
        %599 = vmatprep.subr.bf16.mxu0 0
        %600 = vmatpush2.bf16.msra.mxu0 0
        %601 = vmatprep.subr.bf16.mxu0 0
        %602 = vmatpush2.bf16.msra.mxu0 0
        %603 = vmatprep.subr.bf16.mxu0 0
        %604 = vmatpush2.bf16.msra.mxu0 0
        %605 = vmatprep.subr.bf16.mxu0 0
        %606 = vmatpush2.bf16.msra.mxu0 0
        %607 = vmatprep.subr.bf16.mxu0 0
        %608 = vmatpush2.bf16.msra.mxu0 0
        %609 = vmatprep.subr.bf16.mxu0 0
        %610 = vmatpush2.bf16.msra.mxu0 0
        %611 = vmatprep.mubr.bf16.mxu0 0
        %612 = vmatmul.mubr.bf16.gmra.mxu0 %v527
        %v613 = vpop.f32.mrf.mxu0
        %v614 = vadd.f32 0.0, %v613
        %v615 = vpop.f32.mrf.mxu0
        %v616 = vpop.f32.mrf.mxu0
        %v617 = vadd.f32 0.0, %v616
        %v618 = vpop.f32.mrf.mxu0
        %619 = vmatprep.mubr.bf16.mxu0 0
        %620 = vmatmul.mubr.bf16.gmra.mxu0 %v528
        %v621 = vpop.f32.mrf.mxu0
        %v622 = vadd.f32 0.0, %v621
        %v623 = vpop.f32.mrf.mxu0
        %v624 = vpop.f32.mrf.mxu0
        %v625 = vadd.f32 0.0, %v624
        %v626 = vpop.f32.mrf.mxu0
        %627 = vdwg.mxu0
        %629 = vrot.lane.b32.xlu0 %v493, 64
        %v630 = vpop.permute.xlu0 %629
        %v632 = vpack.c.bf16 %v630, %v493
        %v633 = vpack.c.bf16 %v617, %v614
        %vm634 = vcmask 523264
        %v636 = vsel %vm634, %v632, 0
        %v639 = vsel %vm634, %v633, 0
        %641 = vmatprep.subr.bf16.mxu0 0
        %642 = vmatpush1.bf16.xpose.msra.mxu0 0
        %643 = vmatprep.subr.bf16.mxu0 0
        %644 = vmatpush1.bf16.xpose.msra.mxu0 0
        %645 = vmatprep.subr.bf16.mxu0 0
        %646 = vmatpush1.bf16.xpose.msra.mxu0 0
        %647 = vmatprep.subr.bf16.mxu0 0
        %648 = vmatpush1.bf16.xpose.msra.mxu0 0
        %649 = vmatprep.subr.bf16.mxu0 0
        %650 = vmatpush1.bf16.xpose.msra.mxu0 0
        %651 = vmatprep.subr.bf16.mxu0 0
        %652 = vmatpush1.bf16.xpose.msra.mxu0 0
        %653 = vmatprep.subr.bf16.mxu0 0
        %654 = vmatpush1.bf16.xpose.msra.mxu0 0
        %655 = vmatprep.subr.bf16.mxu0 0
        %656 = vmatpush1.bf16.xpose.msra.mxu0 %v639
        %657 = vmatprep.subr.bf16.mxu0 0
        %658 = vmatpush2.bf16.xpose.msra.mxu0 0
        %659 = vmatprep.subr.bf16.mxu0 0
        %660 = vmatpush2.bf16.xpose.msra.mxu0 0
        %661 = vmatprep.subr.bf16.mxu0 0
        %662 = vmatpush2.bf16.xpose.msra.mxu0 0
        %663 = vmatprep.subr.bf16.mxu0 0
        %664 = vmatpush2.bf16.xpose.msra.mxu0 0
        %665 = vmatprep.subr.bf16.mxu0 0
        %666 = vmatpush2.bf16.xpose.msra.mxu0 0
        %667 = vmatprep.subr.bf16.mxu0 0
        %668 = vmatpush2.bf16.xpose.msra.mxu0 0
        %669 = vmatprep.subr.bf16.mxu0 0
        %670 = vmatpush2.bf16.xpose.msra.mxu0 0
        %671 = vmatprep.subr.bf16.mxu0 0
        %672 = vmatpush2.bf16.xpose.msra.mxu0 0
        %673 = vmatprep.mubr.bf16.mxu0 0
        %674 = vmatmul.mubr.bf16.gmra.mxu0 %v636
        %v675 = vpop.f32.mrf.mxu0
        %v676 = vadd.f32 0.0, %v675
        %v677 = vpop.f32.mrf.mxu0
        %v678 = vpop.f32.mrf.mxu0
        %v679 = vadd.f32 0.0, %v678
        %v680 = vpop.f32.mrf.mxu0
        %681 = vdwg.mxu0
        %vm682 = vcmask 130048
        %v683 = vsel %vm682, %v676, -inf
        %684 = vmax.xlane.f32.xlu0 %v683
        %v685 = vpop.xlane.xlu0 %684
        %v686 = vsel %vm682, %v679, -inf
        %687 = vmax.xlane.f32.xlu0 %v686
        %v688 = vpop.xlane.xlu0 %687
        %v689 = vsub.f32 %v676, %v685
        %v690 = vsub.f32 %v679, %v688
        %v691 = vmul.f32 %v689, 1.442695
        %v692 = vpow.pop %v691
        %v693 = vmul.f32 %v690, 1.442695
        %v694 = vpow.pop %v693
        %v695 = vsel %vm682, %v692, 0.0
        %696 = vadd.xlane.f32.xlu0 %v695
        %v697 = vpop.xlane.xlu0 %696
        %v698 = vsel %vm682, %v694, 0.0
        %699 = vadd.xlane.f32.xlu0 %v698
        %v700 = vpop.xlane.xlu0 %699
        %v701 = vrcp.pop %v697
        %v702 = vrcp.pop %v700
        %v703 = vmul.f32 %v692, %v701
        %v704 = vmul.f32 %v694, %v702
        %v705 = vpack.c.bf16 %v704, %v703
        %707 = vrot.lane.b32.xlu0 %v633, 64
        %v708 = vpop.permute.xlu0 %707
        %v711 = vsel %vm682, %v705, 0
        %713 = vmatprep.subr.bf16.mxu0 0
        %714 = vmatpush1.bf16.msra.mxu0 0
        %715 = vmatprep.subr.bf16.mxu0 0
        %716 = vmatpush1.bf16.msra.mxu0 0
        %717 = vmatprep.subr.bf16.mxu0 0
        %718 = vmatpush1.bf16.msra.mxu0 0
        %719 = vmatprep.subr.bf16.mxu0 0
        %720 = vmatpush1.bf16.msra.mxu0 0
        %721 = vmatprep.subr.bf16.mxu0 0
        %722 = vmatpush1.bf16.msra.mxu0 0
        %723 = vmatprep.subr.bf16.mxu0 0
        %724 = vmatpush1.bf16.msra.mxu0 0
        %725 = vmatprep.subr.bf16.mxu0 0
        %726 = vmatpush1.bf16.msra.mxu0 0
        %727 = vmatprep.subr.bf16.mxu0 0
        %728 = vmatpush1.bf16.msra.mxu0 %v708
        %729 = vmatprep.subr.bf16.mxu0 0
        %730 = vmatpush2.bf16.msra.mxu0 0
        %731 = vmatprep.subr.bf16.mxu0 0
        %732 = vmatpush2.bf16.msra.mxu0 0
        %733 = vmatprep.subr.bf16.mxu0 0
        %734 = vmatpush2.bf16.msra.mxu0 0
        %735 = vmatprep.subr.bf16.mxu0 0
        %736 = vmatpush2.bf16.msra.mxu0 0
        %737 = vmatprep.subr.bf16.mxu0 0
        %738 = vmatpush2.bf16.msra.mxu0 0
        %739 = vmatprep.subr.bf16.mxu0 0
        %740 = vmatpush2.bf16.msra.mxu0 0
        %741 = vmatprep.subr.bf16.mxu0 0
        %742 = vmatpush2.bf16.msra.mxu0 0
        %743 = vmatprep.subr.bf16.mxu0 0
        %744 = vmatpush2.bf16.msra.mxu0 0
        %745 = vmatprep.mubr.bf16.mxu0 0
        %746 = vmatmul.mubr.bf16.gmra.mxu0 %v711
        %v747 = vpop.f32.mrf.mxu0
        %v748 = vadd.f32 0.0, %v747
        %v749 = vpop.f32.mrf.mxu0
        %v750 = vpop.f32.mrf.mxu0
        %v751 = vadd.f32 0.0, %v750
        %v752 = vpop.f32.mrf.mxu0
        %753 = vdwg.mxu0
        %755 = vrot.lane.b32.xlu0 %v751, 64
        %v756 = vpop.permute.xlu0 %755
        %v758 = vsel %vm634, %v748, %v756
        %v759 = vpack.c.bf16 %v758, %v758
        %v760 = vld [vmem:[#allocation10] sm:$0xf]
        %v761 = vld [vmem:[#allocation10 + $0x4] sm:$0xf]
        %v762 = vld [vmem:[#allocation10 + $0x8] sm:$0xf]
        %v763 = vld [vmem:[#allocation10 + $0xc] sm:$0xf]
        %v764 = vld [vmem:[#allocation10 + $0x10] sm:$0xf]
        %v765 = vld [vmem:[#allocation10 + $0x14] sm:$0xf]
        %v766 = vld [vmem:[#allocation10 + $0x18] sm:$0xf]
        %v767 = vld [vmem:[#allocation10 + $0x1c] sm:$0xf]
        %v768 = vld [vmem:[#allocation10 + $0x20] sm:$0xf]
        %v769 = vld [vmem:[#allocation10 + $0x24] sm:$0xf]
        %v770 = vld [vmem:[#allocation10 + $0x28] sm:$0xf]
        %v771 = vld [vmem:[#allocation10 + $0x2c] sm:$0xf]
        %v772 = vld [vmem:[#allocation10 + $0x30] sm:$0xf]
        %v773 = vld [vmem:[#allocation10 + $0x34] sm:$0xf]
        %v774 = vld [vmem:[#allocation10 + $0x38] sm:$0xf]
        %v775 = vld [vmem:[#allocation10 + $0x3c] sm:$0xf]
        %v792 = vunpack.c.l.b16 %v760
        %v793 = vunpack.c.l.b16 %v761
        %v794 = vunpack.c.l.b16 %v762
        %v795 = vunpack.c.l.b16 %v763
        %v796 = vunpack.c.l.b16 %v764
        %v797 = vunpack.c.l.b16 %v765
        %v798 = vunpack.c.l.b16 %v766
        %v799 = vunpack.c.l.b16 %v767
        %v800 = vunpack.c.l.b16 %v768
        %v801 = vunpack.c.l.b16 %v769
        %v802 = vunpack.c.l.b16 %v770
        %v803 = vunpack.c.l.b16 %v771
        %v804 = vunpack.c.l.b16 %v772
        %v805 = vunpack.c.l.b16 %v773
        %v806 = vunpack.c.l.b16 %v774
        %v807 = vunpack.c.l.b16 %v775
        %v808 = vpack.c.b16 %v793, %v792
        %v809 = vpack.c.b16 %v795, %v794
        %v810 = vpack.c.b16 %v797, %v796
        %v811 = vpack.c.b16 %v799, %v798
        %v812 = vpack.c.b16 %v801, %v800
        %v813 = vpack.c.b16 %v803, %v802
        %v814 = vpack.c.b16 %v805, %v804
        %v815 = vpack.c.b16 %v807, %v806
        %824 = vmatprep.subr.bf16.mxu0 0
        %825 = vmatpush1.bf16.msra.mxu0 %v815
        %826 = vmatprep.subr.bf16.mxu0 0
        %827 = vmatpush1.bf16.msra.mxu0 %v814
        %828 = vmatprep.subr.bf16.mxu0 0
        %829 = vmatpush1.bf16.msra.mxu0 %v813
        %830 = vmatprep.subr.bf16.mxu0 0
        %831 = vmatpush1.bf16.msra.mxu0 %v812
        %832 = vmatprep.subr.bf16.mxu0 0
        %833 = vmatpush1.bf16.msra.mxu0 %v811
        %834 = vmatprep.subr.bf16.mxu0 0
        %835 = vmatpush1.bf16.msra.mxu0 %v810
        %836 = vmatprep.subr.bf16.mxu0 0
        %837 = vmatpush1.bf16.msra.mxu0 %v809
        %838 = vmatprep.subr.bf16.mxu0 0
        %839 = vmatpush1.bf16.msra.mxu0 %v808
        %840 = vmatprep.subr.bf16.mxu0 0
        %841 = vmatpush2.bf16.msra.mxu0 0
        %842 = vmatprep.subr.bf16.mxu0 0
        %843 = vmatpush2.bf16.msra.mxu0 0
        %844 = vmatprep.subr.bf16.mxu0 0
        %845 = vmatpush2.bf16.msra.mxu0 0
        %846 = vmatprep.subr.bf16.mxu0 0
        %847 = vmatpush2.bf16.msra.mxu0 0
        %848 = vmatprep.subr.bf16.mxu0 0
        %849 = vmatpush2.bf16.msra.mxu0 0
        %850 = vmatprep.subr.bf16.mxu0 0
        %851 = vmatpush2.bf16.msra.mxu0 0
        %852 = vmatprep.subr.bf16.mxu0 0
        %853 = vmatpush2.bf16.msra.mxu0 0
        %854 = vmatprep.subr.bf16.mxu0 0
        %855 = vmatpush2.bf16.msra.mxu0 0
        %856 = vmatprep.mubr.bf16.mxu0 0
        %857 = vmatmul.mubr.bf16.gmra.mxu0 %v759
        %v858 = vpop.f32.mrf.mxu0
        %v859 = vadd.f32 0.0, %v858
        %v860 = vpop.f32.mrf.mxu0
        %v861 = vpop.f32.mrf.mxu0
        %v862 = vpop.f32.mrf.mxu0
        %863 = vdwg.mxu0
        %864 = vst [vmem:[%s353] sm:$0xff] %v859
        %866 = vrot.lane.b32.xlu0 %v496, 64
        %v867 = vpop.permute.xlu0 %866
        %v869 = vpack.c.bf16 %v867, %v496
        %v870 = vpack.c.bf16 %v625, %v622
        %v872 = vsel %vm634, %v869, 0
        %v875 = vsel %vm634, %v870, 0
        %877 = vmatprep.subr.bf16.mxu0 0
        %878 = vmatpush1.bf16.xpose.msra.mxu0 0
        %879 = vmatprep.subr.bf16.mxu0 0
        %880 = vmatpush1.bf16.xpose.msra.mxu0 0
        %881 = vmatprep.subr.bf16.mxu0 0
        %882 = vmatpush1.bf16.xpose.msra.mxu0 0
        %883 = vmatprep.subr.bf16.mxu0 0
        %884 = vmatpush1.bf16.xpose.msra.mxu0 0
        %885 = vmatprep.subr.bf16.mxu0 0
        %886 = vmatpush1.bf16.xpose.msra.mxu0 0
        %887 = vmatprep.subr.bf16.mxu0 0
        %888 = vmatpush1.bf16.xpose.msra.mxu0 0
        %889 = vmatprep.subr.bf16.mxu0 0
        %890 = vmatpush1.bf16.xpose.msra.mxu0 0
        %891 = vmatprep.subr.bf16.mxu0 0
        %892 = vmatpush1.bf16.xpose.msra.mxu0 %v875
        %893 = vmatprep.subr.bf16.mxu0 0
        %894 = vmatpush2.bf16.xpose.msra.mxu0 0
        %895 = vmatprep.subr.bf16.mxu0 0
        %896 = vmatpush2.bf16.xpose.msra.mxu0 0
        %897 = vmatprep.subr.bf16.mxu0 0
        %898 = vmatpush2.bf16.xpose.msra.mxu0 0
        %899 = vmatprep.subr.bf16.mxu0 0
        %900 = vmatpush2.bf16.xpose.msra.mxu0 0
        %901 = vmatprep.subr.bf16.mxu0 0
        %902 = vmatpush2.bf16.xpose.msra.mxu0 0
        %903 = vmatprep.subr.bf16.mxu0 0
        %904 = vmatpush2.bf16.xpose.msra.mxu0 0
        %905 = vmatprep.subr.bf16.mxu0 0
        %906 = vmatpush2.bf16.xpose.msra.mxu0 0
        %907 = vmatprep.subr.bf16.mxu0 0
        %908 = vmatpush2.bf16.xpose.msra.mxu0 0
        %909 = vmatprep.mubr.bf16.mxu0 0
        %910 = vmatmul.mubr.bf16.gmra.mxu0 %v872
        %v911 = vpop.f32.mrf.mxu0
        %v912 = vadd.f32 0.0, %v911
        %v913 = vpop.f32.mrf.mxu0
        %v914 = vpop.f32.mrf.mxu0
        %v915 = vadd.f32 0.0, %v914
        %v916 = vpop.f32.mrf.mxu0
        %917 = vdwg.mxu0
        %v918 = vsel %vm682, %v912, -inf
        %919 = vmax.xlane.f32.xlu0 %v918
        %v920 = vpop.xlane.xlu0 %919
        %v921 = vsel %vm682, %v915, -inf
        %922 = vmax.xlane.f32.xlu0 %v921
        %v923 = vpop.xlane.xlu0 %922
        %v924 = vsub.f32 %v912, %v920
        %v925 = vsub.f32 %v915, %v923
        %v926 = vmul.f32 %v924, 1.442695
        %v927 = vpow.pop %v926
        %v928 = vmul.f32 %v925, 1.442695
        %v929 = vpow.pop %v928
        %v930 = vsel %vm682, %v927, 0.0
        %931 = vadd.xlane.f32.xlu0 %v930
        %v932 = vpop.xlane.xlu0 %931
        %v933 = vsel %vm682, %v929, 0.0
        %934 = vadd.xlane.f32.xlu0 %v933
        %v935 = vpop.xlane.xlu0 %934
        %v936 = vrcp.pop %v932
        %v937 = vrcp.pop %v935
        %v938 = vmul.f32 %v927, %v936
        %v939 = vmul.f32 %v929, %v937
        %v940 = vpack.c.bf16 %v939, %v938
        %942 = vrot.lane.b32.xlu0 %v870, 64
        %v943 = vpop.permute.xlu0 %942
        %v946 = vsel %vm682, %v940, 0
        %948 = vmatprep.subr.bf16.mxu0 0
        %949 = vmatpush1.bf16.msra.mxu0 0
        %950 = vmatprep.subr.bf16.mxu0 0
        %951 = vmatpush1.bf16.msra.mxu0 0
        %952 = vmatprep.subr.bf16.mxu0 0
        %953 = vmatpush1.bf16.msra.mxu0 0
        %954 = vmatprep.subr.bf16.mxu0 0
        %955 = vmatpush1.bf16.msra.mxu0 0
        %956 = vmatprep.subr.bf16.mxu0 0
        %957 = vmatpush1.bf16.msra.mxu0 0
        %958 = vmatprep.subr.bf16.mxu0 0
        %959 = vmatpush1.bf16.msra.mxu0 0
        %960 = vmatprep.subr.bf16.mxu0 0
        %961 = vmatpush1.bf16.msra.mxu0 0
        %962 = vmatprep.subr.bf16.mxu0 0
        %963 = vmatpush1.bf16.msra.mxu0 %v943
        %964 = vmatprep.subr.bf16.mxu0 0
        %965 = vmatpush2.bf16.msra.mxu0 0
        %966 = vmatprep.subr.bf16.mxu0 0
        %967 = vmatpush2.bf16.msra.mxu0 0
        %968 = vmatprep.subr.bf16.mxu0 0
        %969 = vmatpush2.bf16.msra.mxu0 0
        %970 = vmatprep.subr.bf16.mxu0 0
        %971 = vmatpush2.bf16.msra.mxu0 0
        %972 = vmatprep.subr.bf16.mxu0 0
        %973 = vmatpush2.bf16.msra.mxu0 0
        %974 = vmatprep.subr.bf16.mxu0 0
        %975 = vmatpush2.bf16.msra.mxu0 0
        %976 = vmatprep.subr.bf16.mxu0 0
        %977 = vmatpush2.bf16.msra.mxu0 0
        %978 = vmatprep.subr.bf16.mxu0 0
        %979 = vmatpush2.bf16.msra.mxu0 0
        %980 = vmatprep.mubr.bf16.mxu0 0
        %981 = vmatmul.mubr.bf16.gmra.mxu0 %v946
        %v982 = vpop.f32.mrf.mxu0
        %v983 = vadd.f32 0.0, %v982
        %v984 = vpop.f32.mrf.mxu0
        %v985 = vpop.f32.mrf.mxu0
        %v986 = vadd.f32 0.0, %v985
        %v987 = vpop.f32.mrf.mxu0
        %988 = vdwg.mxu0
        %990 = vrot.lane.b32.xlu0 %v986, 64
        %v991 = vpop.permute.xlu0 %990
        %v993 = vsel %vm634, %v983, %v991
        %v994 = vpack.c.bf16 %v993, %v993
        %v995 = vld [vmem:[#allocation10] sm:$0xf]
        %v996 = vld [vmem:[#allocation10 + $0x4] sm:$0xf]
        %v997 = vld [vmem:[#allocation10 + $0x8] sm:$0xf]
        %v998 = vld [vmem:[#allocation10 + $0xc] sm:$0xf]
        %v999 = vld [vmem:[#allocation10 + $0x10] sm:$0xf]
        %v1000 = vld [vmem:[#allocation10 + $0x14] sm:$0xf]
        %v1001 = vld [vmem:[#allocation10 + $0x18] sm:$0xf]
        %v1002 = vld [vmem:[#allocation10 + $0x1c] sm:$0xf]
        %v1003 = vld [vmem:[#allocation10 + $0x20] sm:$0xf]
        %v1004 = vld [vmem:[#allocation10 + $0x24] sm:$0xf]
        %v1005 = vld [vmem:[#allocation10 + $0x28] sm:$0xf]
        %v1006 = vld [vmem:[#allocation10 + $0x2c] sm:$0xf]
        %v1007 = vld [vmem:[#allocation10 + $0x30] sm:$0xf]
        %v1008 = vld [vmem:[#allocation10 + $0x34] sm:$0xf]
        %v1009 = vld [vmem:[#allocation10 + $0x38] sm:$0xf]
        %v1010 = vld [vmem:[#allocation10 + $0x3c] sm:$0xf]
        %v1027 = vunpack.c.l.b16 %v995
        %v1028 = vunpack.c.l.b16 %v996
        %v1029 = vunpack.c.l.b16 %v997
        %v1030 = vunpack.c.l.b16 %v998
        %v1031 = vunpack.c.l.b16 %v999
        %v1032 = vunpack.c.l.b16 %v1000
        %v1033 = vunpack.c.l.b16 %v1001
        %v1034 = vunpack.c.l.b16 %v1002
        %v1035 = vunpack.c.l.b16 %v1003
        %v1036 = vunpack.c.l.b16 %v1004
        %v1037 = vunpack.c.l.b16 %v1005
        %v1038 = vunpack.c.l.b16 %v1006
        %v1039 = vunpack.c.l.b16 %v1007
        %v1040 = vunpack.c.l.b16 %v1008
        %v1041 = vunpack.c.l.b16 %v1009
        %v1042 = vunpack.c.l.b16 %v1010
        %v1043 = vpack.c.b16 %v1028, %v1027
        %v1044 = vpack.c.b16 %v1030, %v1029
        %v1045 = vpack.c.b16 %v1032, %v1031
        %v1046 = vpack.c.b16 %v1034, %v1033
        %v1047 = vpack.c.b16 %v1036, %v1035
        %v1048 = vpack.c.b16 %v1038, %v1037
        %v1049 = vpack.c.b16 %v1040, %v1039
        %v1050 = vpack.c.b16 %v1042, %v1041
        %1059 = vmatprep.subr.bf16.mxu0 0
        %1060 = vmatpush1.bf16.msra.mxu0 %v1050
        %1061 = vmatprep.subr.bf16.mxu0 0
        %1062 = vmatpush1.bf16.msra.mxu0 %v1049
        %1063 = vmatprep.subr.bf16.mxu0 0
        %1064 = vmatpush1.bf16.msra.mxu0 %v1048
        %1065 = vmatprep.subr.bf16.mxu0 0
        %1066 = vmatpush1.bf16.msra.mxu0 %v1047
        %1067 = vmatprep.subr.bf16.mxu0 0
        %1068 = vmatpush1.bf16.msra.mxu0 %v1046
        %1069 = vmatprep.subr.bf16.mxu0 0
        %1070 = vmatpush1.bf16.msra.mxu0 %v1045
        %1071 = vmatprep.subr.bf16.mxu0 0
        %1072 = vmatpush1.bf16.msra.mxu0 %v1044
        %1073 = vmatprep.subr.bf16.mxu0 0
        %1074 = vmatpush1.bf16.msra.mxu0 %v1043
        %1075 = vmatprep.subr.bf16.mxu0 0
        %1076 = vmatpush2.bf16.msra.mxu0 0
        %1077 = vmatprep.subr.bf16.mxu0 0
        %1078 = vmatpush2.bf16.msra.mxu0 0
        %1079 = vmatprep.subr.bf16.mxu0 0
        %1080 = vmatpush2.bf16.msra.mxu0 0
        %1081 = vmatprep.subr.bf16.mxu0 0
        %1082 = vmatpush2.bf16.msra.mxu0 0
        %1083 = vmatprep.subr.bf16.mxu0 0
        %1084 = vmatpush2.bf16.msra.mxu0 0
        %1085 = vmatprep.subr.bf16.mxu0 0
        %1086 = vmatpush2.bf16.msra.mxu0 0
        %1087 = vmatprep.subr.bf16.mxu0 0
        %1088 = vmatpush2.bf16.msra.mxu0 0
        %1089 = vmatprep.subr.bf16.mxu0 0
        %1090 = vmatpush2.bf16.msra.mxu0 0
        %1091 = vmatprep.mubr.bf16.mxu0 0
        %1092 = vmatmul.mubr.bf16.gmra.mxu0 %v994
        %v1093 = vpop.f32.mrf.mxu0
        %v1094 = vadd.f32 0.0, %v1093
        %v1095 = vpop.f32.mrf.mxu0
        %v1096 = vpop.f32.mrf.mxu0
        %v1097 = vpop.f32.mrf.mxu0
        %1098 = vdwg.mxu0
        %s1099 = scalar_lea.vmem %s353, 8 [#allocation11]
        %1100 = vst [vmem:[%s1099] sm:$0xff] %v1094
        %s1101 = sand.u32 %s171, 1
        %s1102 = scalar_lea.sflag [#allocation4], %s1101
        %s1103 = sand.u32 %s171, 1
        %s1104 = smul.addr %s1103, 16
        %s1105 = scalar_lea.vmem [#allocation11], %s1104
        // Predicated region
        $region65: #{tpu_custom_call.1} parent=43 // pred_check
          %p1106 = pneg %p181
        $region66: #{tpu_custom_call.1} parent=43 // pred_check_branch
          %1108 = sbr.rel (%p1106) target = $region68
        $region67: #{tpu_custom_call.1} parent=43 // pred_region
          %s1109 = smul.u32 2, %s27
          %s1111 = ssub.s32 256, 256
          %1112 = vsyncadd %s1102, %s1111
          %s1113 = smul.addr %s1109, 128
          %s1114 = scalar_lea.hbm %s6, %s1113
          %s1115 = sshll.u32 %s1105, 4
          %s1116 = int_to_ptr.vmem [resolvable:$true] %s1115
          %1121 = dma.vmem_to_hbm [thread:$0]  %s1116, 256, %s1114, %s1102, 128, 128, 8
        $region68: #{tpu_custom_call.1} parent=43 // pred_fallthru
          _
      $region44: #{tpu_custom_call.1} parent=5 // pred_fallthru
        _
      %p1122 = scmp.le.s32.totalorder 2, %s22
      // Predicated region
      $region69: #{tpu_custom_call.1} parent=5 // pred_check
        %p1123 = pneg %p1122
      $region70: #{tpu_custom_call.1} parent=5 // pred_check_branch
        %1125 = sbr.rel (%p1123) target = $region72
      $region71: #{tpu_custom_call.1} parent=5 // pred_region
        %s1126 = ssub.s32 %s22, 2
        // Predicated region
        $region73: #{tpu_custom_call.1} parent=71 // pred_check
          %p1127 = pneg %p187
        $region74: #{tpu_custom_call.1} parent=71 // pred_check_branch
          %1129 = sbr.rel (%p1127) target = $region76
        $region75: #{tpu_custom_call.1} parent=71 // pred_region
          %s1130 = sand.u32 %s172, 1
          %s1131 = scalar_lea.sflag [#allocation4], %s1130
          %s1132 = sand.u32 %s172, 1
          %s1133 = smul.addr %s1132, 16
          %s1134 = scalar_lea.vmem [#allocation11], %s1133
          %1135 = dma.done %s1131, 256
        $region76: #{tpu_custom_call.1} parent=71 // pred_fallthru
          _
      $region72: #{tpu_custom_call.1} parent=5 // pred_fallthru
        _
    $region6: #{tpu_custom_call.1} parent=1 // loop_footer
      %s26 = sadd.s32 1, %s22
    $region7: #{tpu_custom_call.1} parent=1 // loop_footer_branch
      %21 = sbr.rel target = $region3
    $region8: #{tpu_custom_call.1} parent=1 // loop_exit
      _
    %1136 = vsyncpa [#allocation3], 1
    %s1137 = scalar_lea.sflag [#allocation3], 1
    %1138 = vsyncpa %s1137, 1
    %1139 = vsyncpa [#allocation6], 1
    %s1140 = scalar_lea.sflag [#allocation6], 1
    %1141 = vsyncpa %s1140, 1
    %1142 = vsyncpa [#allocation9], 1
    %1143 = vsyncpa [#allocation4], 1
    %s1144 = scalar_lea.sflag [#allocation4], 1
    %1145 = vsyncpa %s1144, 1

</llo_original>
